<compile_context>
chip_gen: v7x
topology: tpu7x:2x2x1
jax: 0.10.0
libtpu: 0.0.40
codegen_flags: <defaults>
</compile_context>

<pallas_src>
import jax
import jax.numpy as jnp
from jax import lax
from jax.experimental import pallas as pl
from jax.experimental.pallas import tpu as pltpu


_MIB = 1024 * 1024
_HEADROOM_BYTES = 8 * _MIB       # headroom for compiler scratch / semaphores
_MAX_BLOCK_BYTES = 16 * _MIB     # per-input, per-pipeline-buffer cap
_NUM_PARALLEL_CHUNKS = 2         # v7x has 2 TCs; with tight coverage the extra chunk
                                 # costs only a few masked rows on 1-TC v5e/v6e.


def _cdiv(a, b):
    return -(-a // b)


def _round_up(a, b):
    return _cdiv(a, b) * b


def _vmem_limit_bytes():
    """Generation-aware VMEM limit: ~96 MiB on 128-MiB parts, 48 MiB on v7x."""
    try:
        cap = int(pltpu.get_tpu_info().vmem_capacity_bytes)
    except Exception:
        cap = 64 * _MIB          # conservative fallback: v7x physical VMEM
    return max(32 * _MIB, min(96 * _MIB, cap - 16 * _MIB))


def _plan_rows(n_rows, max_tile_rows, row_multiple):
    """Split n_rows into P parallel chunks x `steps` tiles of `tile` rows.

    Coverage P*steps*tile >= n_rows is tight (waste ~<= row_multiple per step), and
    tile never exceeds n_rows, so edge blocks are at worst partial (never fully OOB).
    """
    max_tile_rows = max(row_multiple, (max_tile_rows // row_multiple) * row_multiple)
    p = _NUM_PARALLEL_CHUNKS if _cdiv(n_rows, row_multiple) >= _NUM_PARALLEL_CHUNKS else 1
    rows_per_chunk = _cdiv(n_rows, p)
    steps = max(1, _cdiv(rows_per_chunk, max_tile_rows))
    if p == 1 and steps == 1:
        tile = n_rows            # single exact block (block dim == full dim), no mask
    else:
        tile = _round_up(_cdiv(rows_per_chunk, steps), row_multiple)
    return p, steps, tile


# --------------------------------------------------------------------------- kernels
def _make_elementwise_kernel(n_rows, tile, steps, weighted, need_mask):
    """out(1,C) += sum_rows((w *) (x - t)^2) ; out block is resident across axis 1."""

    def kernel(*refs):
        if weighted:
            x_ref, t_ref, w_ref, out_ref = refs
        else:
            x_ref, t_ref, out_ref = refs
        j = pl.program_id(1)

        @pl.when(j == 0)
        def _():
            out_ref[...] = jnp.zeros_like(out_ref)

        d = x_ref[...] - t_ref[...]
        v = d * d
        if weighted:
            v = w_ref[...] * v
        if need_mask:
            base = (pl.program_id(0) * steps + j) * tile
            row = base + lax.broadcasted_iota(jnp.int32, v.shape, 0)
            v = jnp.where(row < n_rows, v, 0.0)       # ragged-tail / OOB rows -> 0
        out_ref[...] += jnp.sum(v, axis=0, keepdims=True)

    return kernel


def _make_row_weighted_kernel(n_rows, tile, steps, need_mask):
    """out(1,C) += (1,tile) @ (tile,C) MXU dot of row weights against (x-t)^2."""

    def kernel(x_ref, t_ref, w_ref, out_ref):
        j = pl.program_id(1)

        @pl.when(j == 0)
        def _():
            out_ref[...] = jnp.zeros_like(out_ref)

        d = x_ref[...] - t_ref[...]                   # (tile, C)
        d2 = d * d
        w = w_ref[...]                                # (1, tile) lane-dense weights
        if need_mask:
            base = (pl.program_id(0) * steps + j) * tile
            row_col = base + lax.broadcasted_iota(jnp.int32, (tile, 1), 0)
            d2 = jnp.where(row_col < n_rows, d2, 0.0)
            row_lane = base + lax.broadcasted_iota(jnp.int32, (1, tile), 1)
            w = jnp.where(row_lane < n_rows, w, 0.0)
        out_ref[...] += jnp.dot(w, d2, preferred_element_type=jnp.float32)

    return kernel


# --------------------------------------------------------------------------- launchers
def _launch_elementwise(x2, t2, w2=None):
    """Sum of (w *) (x - t)^2 over a (R, C) layout; returns the f32 scalar sum."""
    r, c = x2.shape
    lane_row_bytes = _round_up(c, 128) * 4            # VMEM lane padding of the last dim
    n_streamed = 2 if w2 is None else 3
    limit = _vmem_limit_bytes()
    budget = max(limit - _HEADROOM_BYTES, 4 * _MIB)
    max_tile = budget // (2 * n_streamed * lane_row_bytes)       # 2 pipeline buffers each
    max_tile = min(max_tile, max(1, _MAX_BLOCK_BYTES // lane_row_bytes))
    p, steps, tile = _plan_rows(r, max_tile, row_multiple=8)
    need_mask = (p * steps * tile != r)

    row_map = lambda pi, ji: (pi * steps + ji, 0)
    spec = pl.BlockSpec((tile, c), row_map)
    in_specs = [spec, spec]
    operands = [x2, t2]
    if w2 is not None:
        in_specs.append(spec)
        operands.append(w2)

    kernel = _make_elementwise_kernel(r, tile, steps, w2 is not None, need_mask)
    partials = pl.pallas_call(
        kernel,
        out_shape=jax.ShapeDtypeStruct((p, 1, c), jnp.float32),
        grid_spec=pltpu.PrefetchScalarGridSpec(
            num_scalar_prefetch=0,
            grid=(p, steps),
            in_specs=in_specs,
            out_specs=pl.BlockSpec((None, 1, c), lambda pi, ji: (pi, 0, 0)),
        ),
        compiler_params=pltpu.CompilerParams(
            dimension_semantics=("parallel", "arbitrary"),
            vmem_limit_bytes=limit,
        ),
    )(*operands)
    return jnp.sum(partials)


def _launch_row_weighted(x2, t2, w_row):
    """sum_i w_i * sum_j (x_ij - t_ij)^2 ; x2, t2 : (R, C) f32, w_row : (R,) f32."""
    r, c = x2.shape
    lane_row_bytes = _round_up(c, 128) * 4
    w_row_bytes = 8 * 4                               # (1,tile) block is 8-sublane padded
    limit = _vmem_limit_bytes()
    budget = max(limit - _HEADROOM_BYTES, 4 * _MIB)
    max_tile = budget // (2 * (2 * lane_row_bytes + w_row_bytes))
    max_tile = min(max_tile, max(1, _MAX_BLOCK_BYTES // lane_row_bytes))
    p, steps, tile = _plan_rows(r, max_tile, row_multiple=128)   # lane-aligned w blocks
    need_mask = (p * steps * tile != r)

    w2 = w_row.reshape(1, r)                          # free reshape, lane-dense stream
    row_map = lambda pi, ji: (pi * steps + ji, 0)

    kernel = _make_row_weighted_kernel(r, tile, steps, need_mask)
    partials = pl.pallas_call(
        kernel,
        out_shape=jax.ShapeDtypeStruct((p, 1, c), jnp.float32),
        grid_spec=pltpu.PrefetchScalarGridSpec(
            num_scalar_prefetch=0,
            grid=(p, steps),
            in_specs=[
                pl.BlockSpec((tile, c), row_map),
                pl.BlockSpec((tile, c), row_map),
                pl.BlockSpec((1, tile), lambda pi, ji: (0, pi * steps + ji)),
            ],
            out_specs=pl.BlockSpec((None, 1, c), lambda pi, ji: (pi, 0, 0)),
        ),
        compiler_params=pltpu.CompilerParams(
            dimension_semantics=("parallel", "arbitrary"),
            vmem_limit_bytes=limit,
        ),
    )(x2, t2, w2)
    return jnp.sum(partials)


# --------------------------------------------------------------------------- layout
def _lane_dense(v):
    """2-D lane-dense view of v: free reshape when possible, else the natural trailing
    dim (>=2-D), else a small tail-pad for indivisible 1-D vectors."""
    flat_size = int(v.size)
    for c in (512, 256, 128):
        if flat_size % c == 0:
            return v.reshape(flat_size // c, c)       # free (row-major bitcast) reshape
    if v.ndim >= 2:
        return v.reshape(-1, v.shape[-1])             # free; ragged rows masked in-kernel
    # TODO(synk): 1-D inputs whose length has no 128/256/512 factor take one small
    # tail-pad copy here; typical ptan 1-D batches are tiny so this is negligible.
    padded = _round_up(flat_size, 128)
    v = jnp.pad(v.reshape(-1), (0, padded - flat_size))
    return v.reshape(padded // 128, 128)


# --------------------------------------------------------------------------- public API
def weighted_mse_loss(inp, target, weights=None, size_average=True):
    """Pallas-TPU forward of ptan's WeightedMSELoss."""
    inp = jnp.asarray(inp, jnp.float32)
    target = jnp.asarray(target, jnp.float32)

    if weights is None:
        # nn.MSELoss(size_average): mean over ALL elements if size_average, else sum.
        total = _launch_elementwise(_lane_dense(inp), _lane_dense(target))
        return total / inp.size if size_average else total

    weights = jnp.asarray(weights, jnp.float32).reshape(-1)
    n = weights.shape[0]
    if inp.ndim == 1:
        # 1-D: loss_rows is already per-element -> elementwise-weighted reduction.
        total = _launch_elementwise(_lane_dense(inp), _lane_dense(target),
                                    _lane_dense(weights))
    elif inp.ndim == 2:
        # Row weights: sum over dim=1 then weight per row (MXU-dot kernel).
        total = _launch_row_weighted(inp, target, weights)
    else:
        # TODO(synk): weighted inputs with ndim > 2 (sum over dim=1, weights broadcast
        # over the remaining dims) are not supported by this kernel.
        raise NotImplementedError("weighted path supports 1-D or 2-D inputs only")
    return total / n if size_average else total


# --------------------------------------------------------------------------- reference
def _reference(inp, target, weights=None, size_average=True):
    """Pure-JAX reference mirroring the PyTorch forward."""
    if weights is None:
        se = (inp - target) ** 2
        return jnp.mean(se) if size_average else jnp.sum(se)
    loss_rows = (inp - target) ** 2
    if loss_rows.ndim != 1:
        loss_rows = jnp.sum(loss_rows, axis=1)
    res = jnp.sum(weights * loss_rows)
    if size_average:
        res = res / weights.shape[0]
    return res


if __name__ == "__main__":
    key = jax.random.PRNGKey(0)
    ks = jax.random.split(key, 12)

    # 2-D: batch of 16 rows, 32 features (aligned-ish small case).
    N, D = 16, 32
    inp = jax.random.normal(ks[0], (N, D), dtype=jnp.float32)
    tgt = jax.random.normal(ks[1], (N, D), dtype=jnp.float32)
    w = jax.random.uniform(ks[2], (N,), dtype=jnp.float32)

    # 1-D: 24 scalar predictions (not a multiple of 8/128 on purpose).
    M = 24
    inp1 = jax.random.normal(ks[3], (M,), dtype=jnp.float32)
    tgt1 = jax.random.normal(ks[4], (M,), dtype=jnp.float32)
    w1 = jax.random.uniform(ks[5], (M,), dtype=jnp.float32)

    # 1-D ragged-but-free-reshape case (2304 = 9*256) -> exercises P=2 + row masking.
    L = 2304
    inp2 = jax.random.normal(ks[6], (L,), dtype=jnp.float32)
    tgt2 = jax.random.normal(ks[7], (L,), dtype=jnp.float32)
    w2 = jax.random.uniform(ks[8], (L,), dtype=jnp.float32)

    # 2-D ragged row-weighted case -> exercises 128-aligned tiles + in-kernel masking.
    N3, D3 = 300, 48
    inp3 = jax.random.normal(ks[9], (N3, D3), dtype=jnp.float32)
    tgt3 = jax.random.normal(ks[10], (N3, D3), dtype=jnp.float32)
    w3 = jax.random.uniform(ks[11], (N3,), dtype=jnp.float32)

    # 4-D unweighted case (nn.MSELoss path).
    inp4 = jax.random.normal(ks[0], (2, 4, 16, 16), dtype=jnp.float32)
    tgt4 = jax.random.normal(ks[1], (2, 4, 16, 16), dtype=jnp.float32)

    checks = [
        (weighted_mse_loss(inp, tgt, w, True), _reference(inp, tgt, w, True)),
        (weighted_mse_loss(inp, tgt, w, False), _reference(inp, tgt, w, False)),
        (weighted_mse_loss(inp, tgt, None, True), _reference(inp, tgt, None, True)),
        (weighted_mse_loss(inp, tgt, None, False), _reference(inp, tgt, None, False)),
        (weighted_mse_loss(inp1, tgt1, w1, True), _reference(inp1, tgt1, w1, True)),
        (weighted_mse_loss(inp1, tgt1, None, True), _reference(inp1, tgt1, None, True)),
        (weighted_mse_loss(inp2, tgt2, w2, True), _reference(inp2, tgt2, w2, True)),
        (weighted_mse_loss(inp2, tgt2, None, False), _reference(inp2, tgt2, None, False)),
        (weighted_mse_loss(inp3, tgt3, w3, True), _reference(inp3, tgt3, w3, True)),
        (weighted_mse_loss(inp3, tgt3, w3, False), _reference(inp3, tgt3, w3, False)),
        (weighted_mse_loss(inp4, tgt4, None, True), _reference(inp4, tgt4, None, True)),
    ]
    for got, want in checks:
        got = jax.block_until_ready(got)
        assert jnp.allclose(got, want, rtol=1e-4, atol=1e-5), (got, want)

    print("KERNEL_OK")
</pallas_src>

<mosaic_0001>
module attributes {stable_mosaic.version = 11 : i64} {
  func.func @kernel(%arg0: i32, %arg1: i32, %arg2: memref<16x32xf32, #tpu.memory_space<vmem>>, %arg3: memref<16x32xf32, #tpu.memory_space<vmem>>, %arg4: memref<1x16xf32, #tpu.memory_space<vmem>>, %arg5: memref<1x1x32xf32, #tpu.memory_space<vmem>>) attributes {dimension_semantics = [#tpu.dimension_semantics<parallel>, #tpu.dimension_semantics<arbitrary>], iteration_bounds = array<i64: 1, 1>, scalar_prefetch = 0 : i64, scratch_operands = 0 : i64, tpu.core_type = #tpu.core_type<tc>, window_params = [{transform_indices = @transform_0, window_bounds = array<i64: 16, 32>}, {transform_indices = @transform_1, window_bounds = array<i64: 16, 32>}, {transform_indices = @transform_2, window_bounds = array<i64: 1, 16>}, {transform_indices = @transform_3, window_bounds = array<i64: 1, 1, 32>}]} {
    %c0_i32 = arith.constant 0 : i32
    %0 = arith.cmpi eq, %arg1, %c0_i32 : i32
    %1 = arith.extui %0 : i1 to i32
    %c0_i32_0 = arith.constant 0 : i32
    %2 = arith.cmpi ne, %1, %c0_i32_0 : i32
    scf.if %2 {
      %cst_12 = arith.constant 0.000000e+00 : f32
      %15 = vector.broadcast %cst_12 : f32 to vector<1x32xf32>
      %c0_13 = arith.constant 0 : index
      %c0_14 = arith.constant 0 : index
      %c0_15 = arith.constant 0 : index
      %16 = vector.load %arg5[%c0_13, %c0_14, %c0_15] : memref<1x1x32xf32, #tpu.memory_space<vmem>>, vector<1x1x32xf32>
      %17 = vector.shape_cast %16 : vector<1x1x32xf32> to vector<1x32xf32>
      %18 = vector.shape_cast %15 : vector<1x32xf32> to vector<1x1x32xf32>
      tpu.vector_store %arg5[%c0_13, %c0_14, %c0_15], %18 {strides = array<i32>} : memref<1x1x32xf32, #tpu.memory_space<vmem>>, vector<1x1x32xf32>,
    } else {
    }
    %c0 = arith.constant 0 : index
    %c0_1 = arith.constant 0 : index
    %3 = vector.load %arg2[%c0, %c0_1] : memref<16x32xf32, #tpu.memory_space<vmem>>, vector<16x32xf32>
    %c0_2 = arith.constant 0 : index
    %c0_3 = arith.constant 0 : index
    %4 = vector.load %arg3[%c0_2, %c0_3] : memref<16x32xf32, #tpu.memory_space<vmem>>, vector<16x32xf32>
    %5 = arith.subf %3, %4 : vector<16x32xf32>
    %6 = arith.mulf %5, %5 : vector<16x32xf32>
    %c0_4 = arith.constant 0 : index
    %c0_5 = arith.constant 0 : index
    %7 = vector.load %arg4[%c0_4, %c0_5] : memref<1x16xf32, #tpu.memory_space<vmem>>, vector<1x16xf32>
    %c0_6 = arith.constant 0 : index
    %c0_7 = arith.constant 0 : index
    %c0_8 = arith.constant 0 : index
    %8 = vector.load %arg5[%c0_6, %c0_7, %c0_8] : memref<1x1x32xf32, #tpu.memory_space<vmem>>, vector<1x1x32xf32>
    %9 = vector.shape_cast %8 : vector<1x1x32xf32> to vector<1x32xf32>
    %cst = arith.constant dense<0.000000e+00> : vector<1x32xf32>
    %10 = tpu.matmul %7, %6, %cst {dimension_numbers = #tpu.dot_dimension_numbers<[1], [0], [0], [1], [0, 0, 1, 1], [], []>} : vector<1x16xf32>, vector<16x32xf32>, vector<1x32xf32> -> vector<1x32xf32>
    %11 = arith.addf %9, %10 : vector<1x32xf32>
    %c0_9 = arith.constant 0 : index
    %c0_10 = arith.constant 0 : index
    %c0_11 = arith.constant 0 : index
    %12 = vector.load %arg5[%c0_9, %c0_10, %c0_11] : memref<1x1x32xf32, #tpu.memory_space<vmem>>, vector<1x1x32xf32>
    %13 = vector.shape_cast %12 : vector<1x1x32xf32> to vector<1x32xf32>
    %14 = vector.shape_cast %11 : vector<1x32xf32> to vector<1x1x32xf32>
    tpu.vector_store %arg5[%c0_9, %c0_10, %c0_11], %14 {strides = array<i32>} : memref<1x1x32xf32, #tpu.memory_space<vmem>>, vector<1x1x32xf32>,
    return
  }
  func.func @transform_0(%arg0: i32, %arg1: i32) -> (i32, i32) {
    %c1_i32 = arith.constant 1 : i32
    %0 = arith.muli %arg0, %c1_i32 : i32
    %1 = arith.addi %0, %arg1 : i32
    %c0_i32 = arith.constant 0 : i32
    %c0_i32_0 = arith.constant 0 : i32
    return %1, %c0_i32 : i32, i32
  }
  func.func @transform_1(%arg0: i32, %arg1: i32) -> (i32, i32) {
    %c1_i32 = arith.constant 1 : i32
    %0 = arith.muli %arg0, %c1_i32 : i32
    %1 = arith.addi %0, %arg1 : i32
    %c0_i32 = arith.constant 0 : i32
    %c0_i32_0 = arith.constant 0 : i32
    return %1, %c0_i32 : i32, i32
  }
  func.func @transform_2(%arg0: i32, %arg1: i32) -> (i32, i32) {
    %c1_i32 = arith.constant 1 : i32
    %0 = arith.muli %arg0, %c1_i32 : i32
    %1 = arith.addi %0, %arg1 : i32
    %c0_i32 = arith.constant 0 : i32
    %c0_i32_0 = arith.constant 0 : i32
    return %c0_i32, %1 : i32, i32
  }
  func.func @transform_3(%arg0: i32, %arg1: i32) -> (i32, i32, i32) {
    %c0_i32 = arith.constant 0 : i32
    %c0_i32_0 = arith.constant 0 : i32
    %c0_i32_1 = arith.constant 0 : i32
    return %arg0, %c0_i32, %c0_i32_0 : i32, i32, i32
  }
}

</mosaic_0001>

<llo_original>
// kernel: tpu_custom_call.1
$region0: #{tpu_custom_call.1}
  #allocation0 [shape = 'u32[]', space=smem, size = 0x4, offset = 0x4, fixed_abs, tag = 'smem constant byte address 0x4 - core index']
  #allocation1 [shape = 'u32[144,128]{1,0:T(1,128)}', space=vmem, size = 0x12000, scoped, tag = 'internal scratch']
  %s0 = inlined_call_operand.hbm [shape: f32[16,32], index: 0, kind: input, shape index: {}]
  %s1 = inlined_call_operand.hbm [shape: f32[16,32], index: 1, kind: input, shape index: {}]
  %s2 = inlined_call_operand.vmem [shape: f32[1,16], index: 2, kind: input, shape index: {}]
  %s3 = inlined_call_operand.hbm [shape: f32[1,1,32], index: 3, kind: output, shape index: {}]
  %s4 = sld [smem:[#allocation0]]
  $region34: #{tpu_custom_call.1} parent=0
    _
  %s6 = ssub.s32 1, %s4
  %s7 = scalar_select 0, %s6, %s4
  $region1: #{tpu_custom_call.1} parent=0
    #allocation2 [shape = 'u8[8192]{0}', space=vmem, size = 0x2000, scoped, tag = 'input window, operand 0, single buffered']
    #allocation3 [shape = 's32[1]{0}', space=sflag, size = 0x4, scoped, tag = 'scoped memory for tpu_custom_call.1']
    #allocation4 [shape = 's32[1]{0}', space=sflag, size = 0x4, scoped, tag = 'scoped memory for tpu_custom_call.1']
    #allocation5 [shape = 'u8[8192]{0}', space=vmem, size = 0x2000, scoped, tag = 'input window, operand 1, single buffered']
    #allocation6 [shape = 's32[1]{0}', space=sflag, size = 0x4, scoped, tag = 'scoped memory for tpu_custom_call.1']
    #allocation7 [shape = 'u8[512]{0}', space=vmem, size = 0x400, scoped, tag = 'output window, operand 0, single buffered']
    %8 = vsyncpa [#allocation3], 0
    %9 = vsyncpa [#allocation6], 0
    %10 = vsyncpa [#allocation4], 0
    // Predicated region
    $region2: #{tpu_custom_call.1} parent=1 // pred_check
      _
    $region3: #{tpu_custom_call.1} parent=1 // pred_check_branch
      %12 = sbr.rel (0) target = $region5
    $region4: #{tpu_custom_call.1} parent=1 // pred_region
      %s13 = sadd.s32 0, 0
      %s14 = smul.u32 2, %s13
      %s16 = ssub.s32 256, 256
      %17 = vsyncadd [#allocation3], %s16
      %s18 = smul.addr %s14, 128
      %s19 = scalar_lea.hbm %s0, %s18
      %s20 = sshll.u32 [#allocation2], 4
      %s21 = int_to_ptr.vmem [resolvable:$true] %s20
      %26 = dma.hbm_to_vmem [thread:$0]  %s19, 256, %s21, [#allocation3], 128, 128, 8
    $region5: #{tpu_custom_call.1} parent=1 // pred_fallthru
      _
    // Predicated region
    $region6: #{tpu_custom_call.1} parent=1 // pred_check
      _
    $region7: #{tpu_custom_call.1} parent=1 // pred_check_branch
      %28 = sbr.rel (0) target = $region9
    $region8: #{tpu_custom_call.1} parent=1 // pred_region
      %s29 = sadd.s32 0, 0
      %s30 = smul.u32 2, %s29
      %s32 = ssub.s32 256, 256
      %33 = vsyncadd [#allocation6], %s32
      %s34 = smul.addr %s30, 128
      %s35 = scalar_lea.hbm %s1, %s34
      %s36 = sshll.u32 [#allocation5], 4
      %s37 = int_to_ptr.vmem [resolvable:$true] %s36
      %42 = dma.hbm_to_vmem [thread:$0]  %s35, 256, %s37, [#allocation6], 128, 128, 8
    $region9: #{tpu_custom_call.1} parent=1 // pred_fallthru
      _
    // Predicated region
    $region10: #{tpu_custom_call.1} parent=1 // pred_check
      _
    $region11: #{tpu_custom_call.1} parent=1 // pred_check_branch
      %44 = sbr.rel (0) target = $region13
    $region12: #{tpu_custom_call.1} parent=1 // pred_region
      %s45 = sadd.s32 0, 0
      %p46 = scmp.lt.s32.totalorder %s45, 0
      %s47 = scalar_select %p46, %s45, 0
      %s48 = scalar_lea.vmem %s2, %s47
      %s49 = sadd.s32 0, 0
    $region13: #{tpu_custom_call.1} parent=1 // pred_fallthru
      _
    // Predicated region
    $region14: #{tpu_custom_call.1} parent=1 // pred_check
      _
    $region15: #{tpu_custom_call.1} parent=1 // pred_check_branch
      %51 = sbr.rel (0) target = $region17
    $region16: #{tpu_custom_call.1} parent=1 // pred_region
      %52 = dma.done [#allocation3], 256
    $region17: #{tpu_custom_call.1} parent=1 // pred_fallthru
      _
    // Predicated region
    $region18: #{tpu_custom_call.1} parent=1 // pred_check
      _
    $region19: #{tpu_custom_call.1} parent=1 // pred_check_branch
      %54 = sbr.rel (0) target = $region21
    $region20: #{tpu_custom_call.1} parent=1 // pred_region
      %55 = dma.done [#allocation6], 256
    $region21: #{tpu_custom_call.1} parent=1 // pred_fallthru
      _
    %s56 = sadd.s32 0, 0
    %p57 = scmp.lt.s32.totalorder %s56, 0
    %s58 = scalar_select %p57, %s56, 0
    %s59 = scalar_lea.vmem %s2, %s58
    %s60 = sadd.s32 0, 0
    %s61 = smul.u32 2, %s60
    %s62 = sadd.s32 0, 0
    %s63 = smul.u32 2, %s62
    %s64 = sadd.s32 0, 0
    %p65 = scmp.lt.s32.totalorder %s64, 0
    %s66 = scalar_select %p65, %s64, 0
    %s67 = scalar_lea.vmem %s2, %s66
    %s68 = sadd.s32 0, 0
    %p69 = scmp.eq.s32.totalorder 0, 0
    // Predicated region
    $region22: #{tpu_custom_call.1} parent=1 // pred_check
      %p70 = pneg %p69
    $region23: #{tpu_custom_call.1} parent=1 // pred_check_branch
      %72 = sbr.rel (%p70) target = $region25
    $region24: #{tpu_custom_call.1} parent=1 // pred_region
      %vm73 = vcmask 253952
      %74 = vst.msk [vmem:[#allocation7] sm:$0x1] %vm73, 0.0
    $region25: #{tpu_custom_call.1} parent=1 // pred_fallthru
      _
    %v75 = vld [vmem:[#allocation2] sm:$0xff]
    %v76 = vld [vmem:[#allocation2 + $0x8] sm:$0xff]
    %v77 = vld [vmem:[#allocation5] sm:$0xff]
    %v78 = vld [vmem:[#allocation5 + $0x8] sm:$0xff]
    %v79 = vsub.f32 %v75, %v77
    %v80 = vsub.f32 %v76, %v78
    %v81 = vmul.f32 %v79, %v79
    %v82 = vmul.f32 %v80, %v80
    %v83 = vld [vmem:[%s67] sm:$0x1]
    %v84 = vld [vmem:[#allocation7] sm:$0x1]
    %vm85 = vcmask 130048
    %v87 = vsel %vm85, %v83, 0
    %89 = vmatprep.subr.mxu0 0.0
    %90 = vmatpush1.msra.mxu0 %v81
    %91 = vmatprep.subr.mxu0 0.0
    %92 = vmatpush1.msra.mxu0 %v82
    %93 = vmatprep.subr.mxu0 0.0
    %94 = vmatpush1.msra.mxu0 0.0
    %95 = vmatprep.subr.mxu0 0.0
    %96 = vmatpush1.msra.mxu0 0.0
    %97 = vmatprep.subr.mxu0 0.0
    %98 = vmatpush1.msra.mxu0 0.0
    %99 = vmatprep.subr.mxu0 0.0
    %100 = vmatpush1.msra.mxu0 0.0
    %101 = vmatprep.subr.mxu0 0.0
    %102 = vmatpush1.msra.mxu0 0.0
    %103 = vmatprep.subr.mxu0 0.0
    %104 = vmatpush1.msra.mxu0 0.0
    %105 = vmatprep.subr.mxu0 0.0
    %106 = vmatpush1.msra.mxu0 0.0
    %107 = vmatprep.subr.mxu0 0.0
    %108 = vmatpush1.msra.mxu0 0.0
    %109 = vmatprep.subr.mxu0 0.0
    %110 = vmatpush1.msra.mxu0 0.0
    %111 = vmatprep.subr.mxu0 0.0
    %112 = vmatpush1.msra.mxu0 0.0
    %113 = vmatprep.subr.mxu0 0.0
    %114 = vmatpush1.msra.mxu0 0.0
    %115 = vmatprep.subr.mxu0 0.0
    %116 = vmatpush1.msra.mxu0 0.0
    %117 = vmatprep.subr.mxu0 0.0
    %118 = vmatpush1.msra.mxu0 0.0
    %119 = vmatprep.subr.mxu0 0.0
    %120 = vmatpush1.msra.mxu0 0.0
    %121 = vmatprep.subr.mxu0 0.0
    %122 = vmatpush1.msra.mxu0 0.0
    %123 = vmatprep.subr.mxu0 0.0
    %124 = vmatpush1.msra.mxu0 0.0
    %125 = vmatprep.subr.mxu0 0.0
    %126 = vmatpush1.msra.mxu0 0.0
    %127 = vmatprep.subr.mxu0 0.0
    %128 = vmatpush1.msra.mxu0 0.0
    %129 = vmatprep.subr.mxu0 0.0
    %130 = vmatpush1.msra.mxu0 0.0
    %131 = vmatprep.subr.mxu0 0.0
    %132 = vmatpush1.msra.mxu0 0.0
    %133 = vmatprep.subr.mxu0 0.0
    %134 = vmatpush1.msra.mxu0 0.0
    %135 = vmatprep.subr.mxu0 0.0
    %136 = vmatpush1.msra.mxu0 0.0
    %137 = vmatprep.subr.mxu0 0.0
    %138 = vmatpush1.msra.mxu0 0.0
    %139 = vmatprep.subr.mxu0 0.0
    %140 = vmatpush1.msra.mxu0 0.0
    %141 = vmatprep.subr.mxu0 0.0
    %142 = vmatpush1.msra.mxu0 0.0
    %143 = vmatprep.subr.mxu0 0.0
    %144 = vmatpush1.msra.mxu0 0.0
    %145 = vmatprep.subr.mxu0 0.0
    %146 = vmatpush1.msra.mxu0 0.0
    %147 = vmatprep.subr.mxu0 0.0
    %148 = vmatpush1.msra.mxu0 0.0
    %149 = vmatprep.subr.mxu0 0.0
    %150 = vmatpush1.msra.mxu0 0.0
    %151 = vmatprep.subr.mxu0 0.0
    %152 = vmatpush1.msra.mxu0 0.0
    %153 = vmatprep.mubr.f32.mxu0 0.0
    %154 = vmatmul.mubr.f32.gmra.mrb[0].mxu0 %v87
    %v155 = vpop.f32.mrb[0].mxu0
    %v156 = vadd.f32 0.0, %v155
    %v157 = vpop.f32.mrb[0].mxu0
    %158 = vdwg.mxu0
    %v159 = vadd.f32 %v84, %v156
    %vm160 = vcmask 253952
    %161 = vst.msk [vmem:[#allocation7] sm:$0x1] %vm160, %v159
    // Predicated region
    $region26: #{tpu_custom_call.1} parent=1 // pred_check
      _
    $region27: #{tpu_custom_call.1} parent=1 // pred_check_branch
      %163 = sbr.rel (0) target = $region29
    $region28: #{tpu_custom_call.1} parent=1 // pred_region
      %s165 = ssub.s32 16, 16
      %166 = vsyncadd [#allocation4], %s165
      %s168 = sshll.u32 [#allocation7], 4
      %s169 = int_to_ptr.vmem [resolvable:$true] %s168
      %171 = dma.vmem_to_hbm [thread:$0]  %s169, 16, %s3, [#allocation4]
    $region29: #{tpu_custom_call.1} parent=1 // pred_fallthru
      _
    // Predicated region
    $region30: #{tpu_custom_call.1} parent=1 // pred_check
      _
    $region31: #{tpu_custom_call.1} parent=1 // pred_check_branch
      %173 = sbr.rel (0) target = $region33
    $region32: #{tpu_custom_call.1} parent=1 // pred_region
      %174 = dma.done [#allocation4], 16
    $region33: #{tpu_custom_call.1} parent=1 // pred_fallthru
      _
    %175 = vsyncpa [#allocation3], 1
    %176 = vsyncpa [#allocation6], 1
    %177 = vsyncpa [#allocation4], 1

</llo_original>
